<compile_context>
chip_gen: v6e
topology: v6e:2x2x1
jax: 0.10.0
libtpu: 0.0.40
codegen_flags: <defaults>
</compile_context>

<pallas_src>
import jax
import jax.numpy as jnp
from jax import lax
from jax.experimental import pallas as pl
from jax.experimental.pallas import tpu as pltpu

_EPS = 1e-12  # matches torch.nn.functional.normalize default eps


def _round_up(x: int, m: int) -> int:
    return ((x + m - 1) // m) * m


# ---------------------------------------------------------------------------
# forward (gather) path: scale * normalize(weight[indices], dim=-1)
# ---------------------------------------------------------------------------
def embedding_forward(indices, weight):
    """indices: int array [...], weight: [V, E] -> [..., E]."""
    orig_shape = indices.shape
    idx = indices.reshape(-1).astype(jnp.int32)
    N = idx.shape[0]
    V, E = weight.shape
    scale = float(E) ** 0.5

    # Batch T tokens per grid step (amortizes ~0.35us/step overhead, makes the
    # (T, E) output block sublane-dense).  Keep W row-gather DMAs in flight.
    T = min(128, _round_up(N, 8))
    W = min(8, T)
    N_pad = _round_up(N, T)
    idx_p = idx if N_pad == N else jnp.pad(idx, (0, N_pad - N))

    def kernel(idx_ref, w_hbm, o_ref, buf, sems):
        base = pl.program_id(0) * T

        def row_copy(t, slot, row):
            return pltpu.make_async_copy(
                w_hbm.at[pl.ds(row, 1), :],
                buf.at[pl.ds(t, 1), :],
                sems.at[slot])

        # Prime the window: W gathers in flight.
        @pl.loop(0, W)
        def _(t):
            row_copy(t, t, idx_ref[base + t]).start()

        # Sliding window: wait row t, immediately issue row t + W.
        @pl.loop(0, T)
        def _(t):
            slot = t % W
            row_copy(t, slot, 0).wait()

            @pl.when(t + W < T)
            def _():
                row_copy(t + W, slot, idx_ref[base + t + W]).start()

        rows = buf[...].astype(jnp.float32)
        ssq = jnp.sum(rows * rows, axis=-1, keepdims=True)
        # 1 / max(||row||, eps) == rsqrt(max(||row||^2, eps^2)); rsqrt -> EUP.
        inv = lax.rsqrt(jnp.maximum(ssq, _EPS * _EPS))
        o_ref[...] = (rows * (scale * inv)).astype(o_ref.dtype)

    # TODO(synk): token ids are not bounds-checked; out-of-range ids gather an
    # arbitrary (but in-bounds-of-HBM only if id < V) weight row, like torch.
    out = pl.pallas_call(
        kernel,
        out_shape=jax.ShapeDtypeStruct((N_pad, E), weight.dtype),
        grid_spec=pltpu.PrefetchScalarGridSpec(
            num_scalar_prefetch=1,                        # token ids -> SMEM
            grid=(N_pad // T,),
            in_specs=[pl.BlockSpec(memory_space=pl.ANY)],  # weight stays in HBM
            out_specs=pl.BlockSpec((T, E), lambda i, idx_ref: (i, 0)),
            scratch_shapes=[
                pltpu.VMEM((T, E), weight.dtype),
                pltpu.SemaphoreType.DMA((W,)),
            ]),
        compiler_params=pltpu.CompilerParams(
            dimension_semantics=("parallel",)),
    )(idx_p, weight)
    return out[:N].reshape(*orig_shape, E)


# ---------------------------------------------------------------------------
# inverse path: x @ normalize(weight, dim=-1).T
# ---------------------------------------------------------------------------
def embedding_inverse(x, weight):
    """x: [..., E], weight: [V, E] -> [..., V]."""
    *lead, E = x.shape
    x2 = x.reshape(-1, E)
    N = x2.shape[0]
    V = weight.shape[0]

    # Lane-dense vocab tiles (multiple of 128), sublane-dense token tiles.
    # The contraction dim E stays whole per block (typical embed dims fit).
    # TODO(synk): add an E grid axis + f32 accumulator scratch for very large E.
    tm = min(256, _round_up(N, 8))
    tn = min(512, _round_up(V, 128))
    N_pad = _round_up(N, tm)
    V_pad = _round_up(V, tn)

    x_p = x2 if N_pad == N else jnp.pad(x2, ((0, N_pad - N), (0, 0)))
    w_p = weight if V_pad == V else jnp.pad(weight, ((0, V_pad - V), (0, 0)))

    # Per-row inverse norm, computed once and reused by every token tile
    # (replaces V*E divides per tile with tn multiplies on the output tile).
    ssq = jnp.sum(w_p.astype(jnp.float32) ** 2, axis=-1)
    inv_norm = lax.rsqrt(jnp.maximum(ssq, _EPS * _EPS)).reshape(1, V_pad)

    def kernel(x_ref, w_ref, s_ref, o_ref):
        # Native-dtype operands on the MXU, f32 accumulation, contract last
        # axes of both operands directly (no explicit .T / XLU transpose).
        acc = lax.dot_general(
            x_ref[...], w_ref[...],
            dimension_numbers=(((1,), (1,)), ((), ())),
            preferred_element_type=jnp.float32)            # (tm, tn)
        o_ref[...] = (acc * s_ref[...]).astype(o_ref.dtype)

    out = pl.pallas_call(
        kernel,
        out_shape=jax.ShapeDtypeStruct((N_pad, V_pad), x.dtype),
        grid_spec=pltpu.PrefetchScalarGridSpec(
            num_scalar_prefetch=0,
            grid=(N_pad // tm, V_pad // tn),
            in_specs=[
                pl.BlockSpec((tm, E), lambda i, j: (i, 0)),
                pl.BlockSpec((tn, E), lambda i, j: (j, 0)),
                pl.BlockSpec((1, tn), lambda i, j: (0, j)),
            ],
            out_specs=pl.BlockSpec((tm, tn), lambda i, j: (i, j)),
        ),
        compiler_params=pltpu.CompilerParams(
            dimension_semantics=("parallel", "parallel")),
    )(x_p, w_p, inv_norm)
    return out[:N, :V].reshape(*lead, V)


if __name__ == "__main__":
    key = jax.random.PRNGKey(0)
    k_w, k_idx = jax.random.split(key)

    vocab_dim, embed_dim = 64, 32
    batch, seq = 2, 8

    # nn.init.uniform_(weight, -0.01, 0.01), deterministic
    weight = jax.random.uniform(
        k_w, (vocab_dim, embed_dim), jnp.float32, minval=-0.01, maxval=0.01)
    idx = jax.random.randint(k_idx, (batch, seq), 0, vocab_dim, jnp.int32)

    # forward (token embedding)
    emb = embedding_forward(idx, weight)
    jax.block_until_ready(emb)

    # forward with inverse=True (project back onto vocab)
    logits = embedding_inverse(emb, weight)
    jax.block_until_ready(logits)

    # pure-JAX reference (matches torch semantics)
    w_norm = weight / jnp.maximum(
        jnp.linalg.norm(weight, axis=-1, keepdims=True), _EPS)
    ref_emb = (embed_dim ** 0.5) * w_norm[idx]
    ref_logits = emb @ w_norm.T

    assert emb.shape == (batch, seq, embed_dim)
    assert logits.shape == (batch, seq, vocab_dim)
    assert jnp.allclose(emb, ref_emb, atol=1e-5), "embedding mismatch"
    assert jnp.allclose(logits, ref_logits, atol=1e-4), "inverse mismatch"

    print("KERNEL_OK")
</pallas_src>

<mosaic_0001>
module attributes {stable_mosaic.version = 11 : i64} {
  func.func @kernel(%arg0: i32, %arg1: memref<16xi32, #tpu.memory_space<smem>>, %arg2: memref<64x32xf32, #tpu.memory_space<any>>, %arg3: memref<16x32xf32, #tpu.memory_space<vmem>>, %arg4: memref<16x32xf32, #tpu.memory_space<vmem>>, %arg5: memref<8x!tpu.dma_semaphore, #tpu.memory_space<semaphore_mem>>) attributes {dimension_semantics = [#tpu.dimension_semantics<parallel>], iteration_bounds = array<i64: 1>, scalar_prefetch = 1 : i64, scratch_operands = 2 : i64, tpu.core_type = #tpu.core_type<tc>, window_params = [{}, {transform_indices = @transform_1, window_bounds = array<i64: 16, 32>}]} {
    %c16_i32 = arith.constant 16 : i32
    %0 = arith.muli %arg0, %c16_i32 : i32
    %c0_i32 = arith.constant 0 : i32
    %c8_i32 = arith.constant 8 : i32
    %1 = arith.addi %c0_i32, %c8_i32 : i32
    %c1_i32 = arith.constant 1 : i32
    scf.for %arg6 = %c0_i32 to %1 step %c1_i32  : i32 {
      %c1_i32_10 = arith.constant 1 : i32
      %15 = arith.muli %arg6, %c1_i32_10 : i32
      %c0_i32_11 = arith.constant 0 : i32
      %16 = arith.addi %c0_i32_11, %15 : i32
      %17 = arith.addi %0, %16 : i32
      %18 = arith.index_cast %17 : i32 to index
      %19 = memref.load %arg1[%18] : memref<16xi32, #tpu.memory_space<smem>>
      %c0_i32_12 = arith.constant 0 : i32
      %20 = tpu.memref_slice %arg2[%19, %c0_i32_12] : memref<64x32xf32, #tpu.memory_space<any>> -> memref<1x32xf32, #tpu.memory_space<any>>
      %c0_i32_13 = arith.constant 0 : i32
      %21 = tpu.memref_slice %arg4[%16, %c0_i32_13] : memref<16x32xf32, #tpu.memory_space<vmem>> -> memref<1x32xf32, #tpu.memory_space<vmem>>
      %22 = tpu.memref_slice %arg5[%16] : memref<8x!tpu.dma_semaphore, #tpu.memory_space<semaphore_mem>> -> memref<1x!tpu.dma_semaphore, #tpu.memory_space<semaphore_mem>>
      %23 = tpu.memref_squeeze %22 : memref<1x!tpu.dma_semaphore, #tpu.memory_space<semaphore_mem>> -> memref<!tpu.dma_semaphore, #tpu.memory_space<semaphore_mem>>
      tpu.enqueue_dma source(%20 : memref<1x32xf32, #tpu.memory_space<any>>) target(%21 : memref<1x32xf32, #tpu.memory_space<vmem>>) target_semaphore(%23 : memref<!tpu.dma_semaphore, #tpu.memory_space<semaphore_mem>>)
    }
    %c8_i32_0 = arith.constant 8 : i32
    %c0_i32_1 = arith.constant 0 : i32
    %c16_i32_2 = arith.constant 16 : i32
    %2 = arith.addi %c0_i32_1, %c16_i32_2 : i32
    %c1_i32_3 = arith.constant 1 : i32
    scf.for %arg6 = %c0_i32_1 to %2 step %c1_i32_3  : i32 {
      %c1_i32_10 = arith.constant 1 : i32
      %15 = arith.muli %arg6, %c1_i32_10 : i32
      %c0_i32_11 = arith.constant 0 : i32
      %16 = arith.addi %c0_i32_11, %15 : i32
      %c8_i32_12 = arith.constant 8 : i32
      %c0_i32_13 = arith.constant 0 : i32
      %17 = arith.cmpi eq, %c8_i32_12, %c0_i32_13 : i32
      %c1_i32_14 = arith.constant 1 : i32
      %18 = arith.select %17, %c1_i32_14, %c8_i32_12 : i32
      %19 = arith.remsi %16, %18 : i32
      %c0_i32_15 = arith.constant 0 : i32
      %20 = arith.cmpi ne, %19, %c0_i32_15 : i32
      %c0_i32_16 = arith.constant 0 : i32
      %21 = arith.cmpi slt, %19, %c0_i32_16 : i32
      %c0_i32_17 = arith.constant 0 : i32
      %22 = arith.cmpi slt, %18, %c0_i32_17 : i32
      %23 = arith.xori %21, %22 : i1
      %24 = arith.andi %23, %20 : i1
      %25 = arith.addi %19, %18 : i32
      %26 = arith.select %24, %25, %19 : i32
      %c0_i32_18 = arith.constant 0 : i32
      %c0_i32_19 = arith.constant 0 : i32
      %27 = tpu.memref_slice %arg2[%c0_i32_18, %c0_i32_19] : memref<64x32xf32, #tpu.memory_space<any>> -> memref<1x32xf32, #tpu.memory_space<any>>
      %c0_i32_20 = arith.constant 0 : i32
      %28 = tpu.memref_slice %arg4[%16, %c0_i32_20] : memref<16x32xf32, #tpu.memory_space<vmem>> -> memref<1x32xf32, #tpu.memory_space<vmem>>
      %29 = tpu.memref_slice %arg5[%26] : memref<8x!tpu.dma_semaphore, #tpu.memory_space<semaphore_mem>> -> memref<1x!tpu.dma_semaphore, #tpu.memory_space<semaphore_mem>>
      %30 = tpu.memref_squeeze %29 : memref<1x!tpu.dma_semaphore, #tpu.memory_space<semaphore_mem>> -> memref<!tpu.dma_semaphore, #tpu.memory_space<semaphore_mem>>
      tpu.wait_dma2 semaphore(%30 : memref<!tpu.dma_semaphore, #tpu.memory_space<semaphore_mem>>) src(%27 : memref<1x32xf32, #tpu.memory_space<any>>) dst(%28 : memref<1x32xf32, #tpu.memory_space<vmem>>)
      %c8_i32_21 = arith.constant 8 : i32
      %31 = arith.addi %16, %c8_i32_21 : i32
      %c16_i32_22 = arith.constant 16 : i32
      %32 = arith.cmpi slt, %31, %c16_i32_22 : i32
      %33 = arith.extui %32 : i1 to i32
      %c0_i32_23 = arith.constant 0 : i32
      %34 = arith.cmpi ne, %33, %c0_i32_23 : i32
      scf.if %34 {
        %c8_i32_24 = arith.constant 8 : i32
        %35 = arith.addi %16, %c8_i32_24 : i32
        %36 = arith.addi %0, %16 : i32
        %c8_i32_25 = arith.constant 8 : i32
        %37 = arith.addi %36, %c8_i32_25 : i32
        %38 = arith.index_cast %37 : i32 to index
        %39 = memref.load %arg1[%38] : memref<16xi32, #tpu.memory_space<smem>>
        %c0_i32_26 = arith.constant 0 : i32
        %40 = tpu.memref_slice %arg2[%39, %c0_i32_26] : memref<64x32xf32, #tpu.memory_space<any>> -> memref<1x32xf32, #tpu.memory_space<any>>
        %c0_i32_27 = arith.constant 0 : i32
        %41 = tpu.memref_slice %arg4[%35, %c0_i32_27] : memref<16x32xf32, #tpu.memory_space<vmem>> -> memref<1x32xf32, #tpu.memory_space<vmem>>
        %42 = tpu.memref_slice %arg5[%26] : memref<8x!tpu.dma_semaphore, #tpu.memory_space<semaphore_mem>> -> memref<1x!tpu.dma_semaphore, #tpu.memory_space<semaphore_mem>>
        %43 = tpu.memref_squeeze %42 : memref<1x!tpu.dma_semaphore, #tpu.memory_space<semaphore_mem>> -> memref<!tpu.dma_semaphore, #tpu.memory_space<semaphore_mem>>
        tpu.enqueue_dma source(%40 : memref<1x32xf32, #tpu.memory_space<any>>) target(%41 : memref<1x32xf32, #tpu.memory_space<vmem>>) target_semaphore(%43 : memref<!tpu.dma_semaphore, #tpu.memory_space<semaphore_mem>>)
      } else {
      }
    }
    %c16_i32_4 = arith.constant 16 : i32
    %c0 = arith.constant 0 : index
    %c0_5 = arith.constant 0 : index
    %3 = vector.load %arg4[%c0, %c0_5] : memref<16x32xf32, #tpu.memory_space<vmem>>, vector<16x32xf32>
    %4 = arith.mulf %3, %3 : vector<16x32xf32>
    %cst = arith.constant dense<0.000000e+00> : vector<16xf32>
    %5 = vector.multi_reduction <add>, %4, %cst [1] : vector<16x32xf32> to vector<16xf32>
    %6 = vector.shape_cast %5 : vector<16xf32> to vector<16x1xf32>
    %cst_6 = arith.constant 1.000000e-24 : f32
    %7 = vector.broadcast %cst_6 : f32 to vector<16x1xf32>
    %8 = arith.maximumf %6, %7 : vector<16x1xf32>
    %9 = math.rsqrt %8 : vector<16x1xf32>
    %cst_7 = arith.constant 5.65685415 : f32
    %10 = vector.broadcast %cst_7 : f32 to vector<16x1xf32>
    %11 = arith.mulf %10, %9 : vector<16x1xf32>
    %12 = vector.broadcast %11 : vector<16x1xf32> to vector<16x32xf32>
    %13 = arith.mulf %3, %12 : vector<16x32xf32>
    %c0_8 = arith.constant 0 : index
    %c0_9 = arith.constant 0 : index
    %14 = vector.load %arg3[%c0_8, %c0_9] : memref<16x32xf32, #tpu.memory_space<vmem>>, vector<16x32xf32>
    tpu.vector_store %arg3[%c0_8, %c0_9], %13 {strides = array<i32>} : memref<16x32xf32, #tpu.memory_space<vmem>>, vector<16x32xf32>,
    return
  }
  func.func @transform_1(%arg0: i32, %arg1: memref<16xi32, #tpu.memory_space<smem>>) -> (i32, i32) {
    %c0_i32 = arith.constant 0 : i32
    %c0_i32_0 = arith.constant 0 : i32
    return %arg0, %c0_i32 : i32, i32
  }
}

</mosaic_0001>

<llo_original>
// kernel: tpu_custom_call.1
$region0: #{tpu_custom_call.1}
  #allocation0 [shape = 'u32[]', space=smem, size = 0x4, offset = 0x4, fixed_abs, tag = 'smem constant byte address 0x4 - core index']
  #allocation1 [shape = 'u32[144,128]{1,0:T(1,128)}', space=vmem, size = 0x12000, scoped, tag = 'internal scratch']
  #allocation2 [shape = 'f32[16,32]{1,0:T(8,128)}', space=vmem, size = 0x2000, scoped, tag = 'scratch operand']
  #allocation3 [shape = 's32[8]{0}', space=sflag, size = 0x20, scoped, tag = 'scratch operand']
  #allocation4 [shape = 's32[1]{0}', space=sflag, size = 0x4, scoped, tag = 'scoped memory for tpu_custom_call.1']
  #allocation5 [shape = 'u8[512]{0}', space=smem, size = 0x200, scoped, tag = 'prefetched SMEM operand 0']
  #allocation8 [shape = 's32[]', space=sflag, size = 0x4, offset = 0, fixed_abs, tag = 'sflag constant byte address 0x0 - dummy sync flag']
  #allocation9 [shape = 's32[]', space=sflag, size = 0x4, offset = 0, fixed_abs, tag = 'sflag constant byte address 0x0 - dummy sync flag']
  %s0 = inlined_call_operand.vmem [shape: s32[16], index: 0, kind: input, shape index: {}]
  %s1 = inlined_call_operand.vmem [shape: f32[64,32], index: 1, kind: input, shape index: {}]
  %s2 = inlined_call_operand.hbm [shape: f32[16,32], index: 2, kind: output, shape index: {}]
  %s3 = sld [smem:[#allocation0]]
  $region88: #{tpu_custom_call.1} parent=0
    _
  %s5 = ssub.s32 1, %s3
  %s6 = scalar_select 0, %s5, %s3
  %s7 = sshll.u32 %s0, 4
  %s8 = int_to_ptr.vmem [resolvable:$true] %s7
  %10 = dma.vmem_to_smem %s8, 16, [#allocation5], [#allocation4]
  %11 = dma.done [#allocation4], 16
  %12 = sfence
  $region1: #{tpu_custom_call.1} parent=0
    #allocation6 [shape = 'u8[8192]{0}', space=vmem, size = 0x2000, scoped, tag = 'output window, operand 0, single buffered']
    #allocation7 [shape = 's32[1]{0}', space=sflag, size = 0x4, scoped, tag = 'scoped memory for tpu_custom_call.1']
    %13 = vsyncpa [#allocation7], 0
    %s14 = smul.u32 0, 16
    loop: start=0, step=1, limit=8
    $region2: #{tpu_custom_call.1} parent=1 // loop_pre_header
      _
    $region3: #{tpu_custom_call.1} parent=1 // loop_header
      %s16 = sphi 0, %s20
      %p17 = scmp.ge.s32.totalorder %s16, 8
    $region4: #{tpu_custom_call.1} parent=1 // loop_header_branch
      %19 = sbr.rel (%p17) target = $region8
    $region5: #{tpu_custom_call.1} parent=1 // loop_body
      %s21 = sadd.s32 %s14, %s16
      %s22 = sld [smem:[#allocation5 + %s21]]
      %s23 = scalar_lea.vmem %s1, %s22
      %s24 = scalar_lea.vmem [#allocation2], %s16
      %s25 = scalar_lea.sflag [#allocation3], %s16
      %p27 = scmp.lt.u32.totalorder 1, 8
      %p28 = pneg %p27
      // Predicated region
      $region9: #{tpu_custom_call.1} parent=5 // pred_check
        _
      $region10: #{tpu_custom_call.1} parent=5 // pred_check_branch
        %30 = sbr.rel (%p27) target = $region12
      $region11: #{tpu_custom_call.1} parent=5 // pred_region
        %s46 = sand.u32 1, 7
        %p47 = scmp.eq.s32.totalorder %s46, 0
        %p48 = pneg %p47
        // Predicated region
        $region24: #{tpu_custom_call.1} parent=11 // pred_check
          _
        $region25: #{tpu_custom_call.1} parent=11 // pred_check_branch
          %50 = sbr.rel (%p47) target = $region27
        $region26: #{tpu_custom_call.1} parent=11 // pred_region
          %s51 = sand.u32 1, 7
          %s52 = ssub.s32 1, %s51
          %s53 = scalar_lea.vmem %s23, %s52
          %s54 = ssub.s32 1, %s51
          %s55 = scalar_lea.vmem %s24, %s54 [#allocation2]
          %s56 = sshll.u32 1, %s51
          %s57 = ssub.s32 %s56, 1
          loop: start=0, step=1, limit=1
          $region28: #{tpu_custom_call.1} parent=26 // loop_pre_header
            _
          $region29: #{tpu_custom_call.1} parent=26 // loop_header
            %s59 = sphi 0, %s63
            %p60 = scmp.ge.s32.totalorder %s59, 1
            %s64 = sphi %s53, %s53
            %s65 = sphi %s55, %s55
          $region30: #{tpu_custom_call.1} parent=26 // loop_header_branch
            %62 = sbr.rel (%p60) target = $region34
          $region31: #{tpu_custom_call.1} parent=26 // loop_body
            %v66 = vld [vmem:[%s64] sm:%s57]
            %67 = vst [vmem:[%s65] sm:%s57] %v66
          $region32: #{tpu_custom_call.1} parent=26 // loop_footer
            %s63 = sadd.s32 1, %s59
          $region33: #{tpu_custom_call.1} parent=26 // loop_footer_branch
            %58 = sbr.rel target = $region29
          $region34: #{tpu_custom_call.1} parent=26 // loop_exit
            _
        $region27: #{tpu_custom_call.1} parent=11 // pred_fallthru
          _
      $region12: #{tpu_custom_call.1} parent=5 // pred_fallthru
        _
      // Predicated region
      $region13: #{tpu_custom_call.1} parent=5 // pred_check
        %p31 = pneg %p27
      $region14: #{tpu_custom_call.1} parent=5 // pred_check_branch
        %33 = sbr.rel (%p31) target = $region16
      $region15: #{tpu_custom_call.1} parent=5 // pred_region
        %s34 = sshll.u32 1, 1
        %s35 = ssub.s32 %s34, 1
        loop: start=0, step=1, limit=1
        $region17: #{tpu_custom_call.1} parent=15 // loop_pre_header
          _
        $region18: #{tpu_custom_call.1} parent=15 // loop_header
          %s37 = sphi 0, %s41
          %p38 = scmp.ge.s32.totalorder %s37, 1
          %s42 = sphi %s23, %s23
          %s43 = sphi %s24, %s24
        $region19: #{tpu_custom_call.1} parent=15 // loop_header_branch
          %40 = sbr.rel (%p38) target = $region23
        $region20: #{tpu_custom_call.1} parent=15 // loop_body
          %v44 = vld [vmem:[%s42] sm:%s35]
          %45 = vst [vmem:[%s43] sm:%s35] %v44
        $region21: #{tpu_custom_call.1} parent=15 // loop_footer
          %s41 = sadd.s32 1, %s37
        $region22: #{tpu_custom_call.1} parent=15 // loop_footer_branch
          %36 = sbr.rel target = $region18
        $region23: #{tpu_custom_call.1} parent=15 // loop_exit
          _
      $region16: #{tpu_custom_call.1} parent=5 // pred_fallthru
        _
      // Predicated region
      $region35: #{tpu_custom_call.1} parent=5 // pred_check
        _
      $region36: #{tpu_custom_call.1} parent=5 // pred_check_branch
        %70 = sbr.rel (0) target = $region38
      $region37: #{tpu_custom_call.1} parent=5 // pred_region
        %71 = vsyncadd %s25, 16
      $region38: #{tpu_custom_call.1} parent=5 // pred_fallthru
        _
    $region6: #{tpu_custom_call.1} parent=1 // loop_footer
      %s20 = sadd.s32 1, %s16
    $region7: #{tpu_custom_call.1} parent=1 // loop_footer_branch
      %15 = sbr.rel target = $region3
    $region8: #{tpu_custom_call.1} parent=1 // loop_exit
      _
    loop: start=0, step=1, limit=16
    $region39: #{tpu_custom_call.1} parent=1 // loop_pre_header
      _
    $region40: #{tpu_custom_call.1} parent=1 // loop_header
      %s73 = sphi 0, %s77
      %p74 = scmp.ge.s32.totalorder %s73, 16
    $region41: #{tpu_custom_call.1} parent=1 // loop_header_branch
      %76 = sbr.rel (%p74) target = $region45
    $region42: #{tpu_custom_call.1} parent=1 // loop_body
      %p78 = scmp.lt.s32.totalorder %s73, 0
      %s79 = ssub.s32 0, %s73
      %s80 = scalar_select %p78, %s79, %s73
      %s81 = sand.u32 %s80, 7
      %s82 = ssub.s32 0, %s81
      %s83 = scalar_select %p78, %s82, %s81
      %p84 = scmp.ne.s32.totalorder %s83, 0
      %p85 = scmp.lt.s32.totalorder %s83, 0
      %p86 = pnand %p85, %p84
      %p87 = pneg %p86
      %s88 = sadd.s32 %s83, 8
      %s89 = scalar_select %p87, %s88, %s83
      %s90 = scalar_lea.sflag [#allocation3], %s89
      %s91 = smul.u32 1, 1
      %s92 = sshll.u32 %s91, 4
      %93 = dma.done %s90, %s92
      %s94 = sadd.s32 %s73, 8
      %p95 = scmp.lt.s32.totalorder %s94, 16
      // Predicated region
      $region46: #{tpu_custom_call.1} parent=42 // pred_check
        %p96 = pneg %p95
      $region47: #{tpu_custom_call.1} parent=42 // pred_check_branch
        %98 = sbr.rel (%p96) target = $region49
      $region48: #{tpu_custom_call.1} parent=42 // pred_region
        %s99 = sadd.s32 %s14, %s73
        %s100 = sadd.s32 %s99, 8
        %s101 = sld [smem:[#allocation5 + %s100]]
        %s102 = scalar_lea.vmem %s1, %s101
        %s103 = scalar_lea.vmem [#allocation2], %s94
        %p105 = scmp.lt.u32.totalorder 1, 8
        %p106 = pneg %p105
        // Predicated region
        $region50: #{tpu_custom_call.1} parent=48 // pred_check
          _
        $region51: #{tpu_custom_call.1} parent=48 // pred_check_branch
          %108 = sbr.rel (%p105) target = $region53
        $region52: #{tpu_custom_call.1} parent=48 // pred_region
          %s124 = sand.u32 1, 7
          %p125 = scmp.eq.s32.totalorder %s124, 0
          %p126 = pneg %p125
          // Predicated region
          $region65: #{tpu_custom_call.1} parent=52 // pred_check
            _
          $region66: #{tpu_custom_call.1} parent=52 // pred_check_branch
            %128 = sbr.rel (%p125) target = $region68
          $region67: #{tpu_custom_call.1} parent=52 // pred_region
            %s129 = sand.u32 1, 7
            %s130 = ssub.s32 1, %s129
            %s131 = scalar_lea.vmem %s102, %s130
            %s132 = ssub.s32 1, %s129
            %s133 = scalar_lea.vmem %s103, %s132 [#allocation2]
            %s134 = sshll.u32 1, %s129
            %s135 = ssub.s32 %s134, 1
            loop: start=0, step=1, limit=1
            $region69: #{tpu_custom_call.1} parent=67 // loop_pre_header
              _
            $region70: #{tpu_custom_call.1} parent=67 // loop_header
              %s137 = sphi 0, %s141
              %p138 = scmp.ge.s32.totalorder %s137, 1
              %s142 = sphi %s131, %s131
              %s143 = sphi %s133, %s133
            $region71: #{tpu_custom_call.1} parent=67 // loop_header_branch
              %140 = sbr.rel (%p138) target = $region75
            $region72: #{tpu_custom_call.1} parent=67 // loop_body
              %v144 = vld [vmem:[%s142] sm:%s135]
              %145 = vst [vmem:[%s143] sm:%s135] %v144
            $region73: #{tpu_custom_call.1} parent=67 // loop_footer
              %s141 = sadd.s32 1, %s137
            $region74: #{tpu_custom_call.1} parent=67 // loop_footer_branch
              %136 = sbr.rel target = $region70
            $region75: #{tpu_custom_call.1} parent=67 // loop_exit
              _
          $region68: #{tpu_custom_call.1} parent=52 // pred_fallthru
            _
        $region53: #{tpu_custom_call.1} parent=48 // pred_fallthru
          _
        // Predicated region
        $region54: #{tpu_custom_call.1} parent=48 // pred_check
          %p109 = pneg %p105
        $region55: #{tpu_custom_call.1} parent=48 // pred_check_branch
          %111 = sbr.rel (%p109) target = $region57
        $region56: #{tpu_custom_call.1} parent=48 // pred_region
          %s112 = sshll.u32 1, 1
          %s113 = ssub.s32 %s112, 1
          loop: start=0, step=1, limit=1
          $region58: #{tpu_custom_call.1} parent=56 // loop_pre_header
            _
          $region59: #{tpu_custom_call.1} parent=56 // loop_header
            %s115 = sphi 0, %s119
            %p116 = scmp.ge.s32.totalorder %s115, 1
            %s120 = sphi %s102, %s102
            %s121 = sphi %s103, %s103
          $region60: #{tpu_custom_call.1} parent=56 // loop_header_branch
            %118 = sbr.rel (%p116) target = $region64
          $region61: #{tpu_custom_call.1} parent=56 // loop_body
            %v122 = vld [vmem:[%s120] sm:%s113]
            %123 = vst [vmem:[%s121] sm:%s113] %v122
          $region62: #{tpu_custom_call.1} parent=56 // loop_footer
            %s119 = sadd.s32 1, %s115
          $region63: #{tpu_custom_call.1} parent=56 // loop_footer_branch
            %114 = sbr.rel target = $region59
          $region64: #{tpu_custom_call.1} parent=56 // loop_exit
            _
        $region57: #{tpu_custom_call.1} parent=48 // pred_fallthru
          _
        // Predicated region
        $region76: #{tpu_custom_call.1} parent=48 // pred_check
          _
        $region77: #{tpu_custom_call.1} parent=48 // pred_check_branch
          %148 = sbr.rel (0) target = $region79
        $region78: #{tpu_custom_call.1} parent=48 // pred_region
          %149 = vsyncadd %s90, 16
        $region79: #{tpu_custom_call.1} parent=48 // pred_fallthru
          _
      $region49: #{tpu_custom_call.1} parent=42 // pred_fallthru
        _
    $region43: #{tpu_custom_call.1} parent=1 // loop_footer
      %s77 = sadd.s32 1, %s73
    $region44: #{tpu_custom_call.1} parent=1 // loop_footer_branch
      %72 = sbr.rel target = $region40
    $region45: #{tpu_custom_call.1} parent=1 // loop_exit
      _
    %v150 = vld [vmem:[#allocation2] sm:$0xff]
    %v151 = vld [vmem:[#allocation2 + $0x8] sm:$0xff]
    %v152 = vmul.f32 %v150, %v150
    %v153 = vmul.f32 %v151, %v151
    %vm154 = vcmask 261120
    %v155 = vsel %vm154, %v152, 0.0
    %156 = vadd.xlane.f32.xlu0 %v155
    %v157 = vpop.xlane.xlu0 %156
    %v158 = vsel %vm154, %v153, 0.0
    %159 = vadd.xlane.f32.xlu0 %v158
    %v160 = vpop.xlane.xlu0 %159
    %v161 = vmax.f32 %v157, 1e-24
    %v162 = vmax.f32 %v160, 1e-24
    %v163 = vrsqrt.pop %v161
    %v164 = vrsqrt.pop %v162
    %v165 = vmul.f32 %v163, 5.656854
    %v166 = vmul.f32 %v164, 5.656854
    %v167 = vmul.f32 %v150, %v165
    %v168 = vmul.f32 %v151, %v166
    %169 = vst.msk [vmem:[#allocation6] sm:$0xff] %vm154, %v167
    %170 = vst.msk [vmem:[#allocation6 + $0x8] sm:$0xff] %vm154, %v168
    // Predicated region
    $region80: #{tpu_custom_call.1} parent=1 // pred_check
      _
    $region81: #{tpu_custom_call.1} parent=1 // pred_check_branch
      %172 = sbr.rel (0) target = $region83
    $region82: #{tpu_custom_call.1} parent=1 // pred_region
      %s174 = ssub.s32 256, 256
      %175 = vsyncadd [#allocation7], %s174
      %s176 = sshll.u32 [#allocation6], 4
      %s177 = int_to_ptr.vmem [resolvable:$true] %s176
      %182 = dma.vmem_to_hbm [thread:$0]  %s177, 256, %s2, [#allocation7], 128, 128, 8
    $region83: #{tpu_custom_call.1} parent=1 // pred_fallthru
      _
    // Predicated region
    $region84: #{tpu_custom_call.1} parent=1 // pred_check
      _
    $region85: #{tpu_custom_call.1} parent=1 // pred_check_branch
      %184 = sbr.rel (0) target = $region87
    $region86: #{tpu_custom_call.1} parent=1 // pred_region
      %185 = dma.done [#allocation7], 256
    $region87: #{tpu_custom_call.1} parent=1 // pred_fallthru
      _
    %186 = vsyncpa [#allocation7], 1
  %187 = vsyncmov [#allocation3]
  %s188 = vpop.sfrf %187
  %p189 = scmp.eq.s32.totalorder %s188, 0
  %p190 = pneg %p189
  %192 = shalt.err (%p190)
  %s193 = scalar_lea.sflag [#allocation3], 1
  %194 = vsyncmov %s193
  %s195 = vpop.sfrf %194
  %p196 = scmp.eq.s32.totalorder %s195, 0
  %p197 = pneg %p196
  %199 = shalt.err (%p197)
  %s200 = scalar_lea.sflag [#allocation3], 2
  %201 = vsyncmov %s200
  %s202 = vpop.sfrf %201
  %p203 = scmp.eq.s32.totalorder %s202, 0
  %p204 = pneg %p203
  %206 = shalt.err (%p204)
  %s207 = scalar_lea.sflag [#allocation3], 3
  %208 = vsyncmov %s207
  %s209 = vpop.sfrf %208
  %p210 = scmp.eq.s32.totalorder %s209, 0
  %p211 = pneg %p210
  %213 = shalt.err (%p211)
  %s214 = scalar_lea.sflag [#allocation3], 4
  %215 = vsyncmov %s214
  %s216 = vpop.sfrf %215
  %p217 = scmp.eq.s32.totalorder %s216, 0
  %p218 = pneg %p217
  %220 = shalt.err (%p218)
  %s221 = scalar_lea.sflag [#allocation3], 5
  %222 = vsyncmov %s221
  %s223 = vpop.sfrf %222
  %p224 = scmp.eq.s32.totalorder %s223, 0
  %p225 = pneg %p224
  %227 = shalt.err (%p225)
  %s228 = scalar_lea.sflag [#allocation3], 6
  %229 = vsyncmov %s228
  %s230 = vpop.sfrf %229
  %p231 = scmp.eq.s32.totalorder %s230, 0
  %p232 = pneg %p231
  %234 = shalt.err (%p232)
  %s235 = scalar_lea.sflag [#allocation3], 7
  %236 = vsyncmov %s235
  %s237 = vpop.sfrf %236
  %p238 = scmp.eq.s32.totalorder %s237, 0
  %p239 = pneg %p238
  %241 = shalt.err (%p239)

</llo_original>
